<compile_context>
chip_gen: v7x
topology: tpu7x:2x2x1
jax: 0.10.0
libtpu: 0.0.40
codegen_flags: <defaults>
</compile_context>

<pallas_src>
import functools

import jax
import jax.numpy as jnp
from jax.experimental import pallas as pl
from jax.experimental.pallas import tpu as pltpu

_BLEND = 0.4   # "beta" in the module: meanTOPK = 0.4*buffer + 0.6*batch_top1
_EPS = 1e-7


# ----------------------------------------------------------------------------
# Tiling / budget helpers
# ----------------------------------------------------------------------------
def _sublane_multiple(itemsize):
    if itemsize >= 4:
        return 8
    if itemsize == 2:
        return 16
    return 32


def _choose_channel_tile(C, bytes_per_channel, target_bytes, sublane):
    """Largest channel tile Ct (divisor of C; multiple of `sublane` or == C)
    whose block stays under target_bytes.  None if no such tile exists."""
    if C * bytes_per_channel <= target_bytes:
        return C
    fitting = [d for d in range(sublane, C, sublane)
               if C % d == 0 and d * bytes_per_channel <= target_bytes]
    return max(fitting) if fitting else None


def _smallest_channel_tile(C, sublane):
    divs = [d for d in range(sublane, C, sublane) if C % d == 0]
    return min(divs) if divs else C


def _vmem_limit_bytes(block_bytes):
    """Scoped-VMEM budget: double-buffered in+out blocks plus headroom, capped
    generation-aware (v7x has only 64 MiB physical VMEM per TensorCore)."""
    phys = 64 << 20                                  # conservative default (v7x)
    try:
        info = pltpu.get_tpu_info()
        phys = int(getattr(info, "vmem_capacity_bytes", phys) or phys)
    except Exception:
        pass
    budget = 6 * block_bytes + (2 << 20)
    return int(min(max(budget, 16 << 20), 40 << 20, (phys * 3) // 5))


def _x_block_spec(block_shape, index_map, buffers=None):
    """BlockSpec with optional deeper pipelining (ignored on jax versions
    without the pipeline_mode kwarg)."""
    if buffers is not None:
        try:
            return pl.BlockSpec(block_shape, index_map,
                                pipeline_mode=pl.Buffered(buffers))
        except TypeError:
            pass
    return pl.BlockSpec(block_shape, index_map)


# ----------------------------------------------------------------------------
# Fused single-pass kernel: stats + normalize with x resident in VMEM.
# Block: (B, Ct, HW).  HBM traffic = 1 read + 1 write of x.
# ----------------------------------------------------------------------------
def _fused_kernel(x_ref, gamma_ref, betap_ref, mtopk_ref,
                  out_ref, mean_out, mtopk_out, *, inv_hw, inv_b):
    x = x_ref[...].astype(jnp.float32)                             # (B, Ct, HW)
    # per-channel mean, computed as mean(-1).mean(0) like the reference
    mean = jnp.sum(jnp.sum(x, axis=2, keepdims=True) * jnp.float32(inv_hw),
                   axis=0) * jnp.float32(inv_b)                    # (Ct, 1)
    x_max = jnp.max(jnp.max(x, axis=2, keepdims=True), axis=0)     # (Ct, 1)
    x_min = jnp.min(jnp.min(x, axis=2, keepdims=True), axis=0)     # (Ct, 1)
    # Exact identity: max_n |x - mean| = max(max_x - mean, mean - min_x)
    dev = jnp.maximum(x_max - mean, mean - x_min)
    meantopk = (jnp.float32(_BLEND) * mtopk_ref[...]
                + jnp.float32(1.0 - _BLEND) * dev)
    a = gamma_ref[...] * pl.reciprocal(meantopk + jnp.float32(_EPS), approx=False)
    b = betap_ref[...] - mean * a
    out_ref[...] = (x * a[None] + b[None]).astype(out_ref.dtype)
    mean_out[...] = mean
    mtopk_out[...] = meantopk


# ----------------------------------------------------------------------------
# Two-pass fallback, pass 1: per-channel statistics, reduced over batch.
# Grid = (C//Ct, B); block (Ct, HW); accumulators (Ct, 1) stay in VMEM.
# ----------------------------------------------------------------------------
def _stats_kernel(x_ref, gamma_ref, betap_ref, mtopk_ref,           # inputs
                  mean_out, mtopk_out, a_out, b_out,                # outputs (Ct,1)
                  sum_acc, max_acc, min_acc,                        # scratch (Ct,1)
                  *, inv_hw, inv_b):
    b = pl.program_id(1)                                            # batch axis

    @pl.when(b == 0)
    def _():
        sum_acc[...] = jnp.zeros_like(sum_acc)
        max_acc[...] = jnp.full_like(max_acc, -jnp.inf)
        min_acc[...] = jnp.full_like(min_acc, jnp.inf)

    x = x_ref[...].astype(jnp.float32)                              # (Ct, HW)
    # per-slab mean (x 1/HW now, x 1/B at the end) to limit f32 drift
    sum_acc[...] += jnp.sum(x, axis=1, keepdims=True) * jnp.float32(inv_hw)
    max_acc[...] = jnp.maximum(max_acc[...], jnp.max(x, axis=1, keepdims=True))
    min_acc[...] = jnp.minimum(min_acc[...], jnp.min(x, axis=1, keepdims=True))

    @pl.when(b == pl.num_programs(1) - 1)
    def _():
        mean = sum_acc[...] * jnp.float32(inv_b)
        dev = jnp.maximum(max_acc[...] - mean, mean - min_acc[...])
        meantopk = (jnp.float32(_BLEND) * mtopk_ref[...]
                    + jnp.float32(1.0 - _BLEND) * dev)
        a = gamma_ref[...] * pl.reciprocal(meantopk + jnp.float32(_EPS),
                                           approx=False)
        mean_out[...] = mean
        mtopk_out[...] = meantopk
        a_out[...] = a
        b_out[...] = betap_ref[...] - mean * a


# ----------------------------------------------------------------------------
# Two-pass fallback, pass 2: out = x * a + b (a, b per-channel, f32 math).
# ----------------------------------------------------------------------------
def _normalize_kernel(x_ref, a_ref, b_ref, out_ref):
    x = x_ref[...].astype(jnp.float32)                              # (Ct, HW)
    out_ref[...] = (x * a_ref[...] + b_ref[...]).astype(out_ref.dtype)


# ----------------------------------------------------------------------------
# Wrapper
# ----------------------------------------------------------------------------
def top1_forward(x_nchw, gamma, beta_param, mean_topk_buf,
                 running_mean, running_var, momentum=0.1, *,
                 force_two_pass=False, block_target_bytes=3 << 20):
    """Training-mode Top1 forward.

    Returns (out, new_meanTOPK, new_running_mean, new_running_var).
    """
    B, C, H, W = x_nchw.shape
    HW = H * W
    in_dtype = x_nchw.dtype
    elt = jnp.dtype(in_dtype).itemsize
    sublane = _sublane_multiple(elt)
    total_elems = B * C * HW

    # Free reshape only (NCHW is contiguous); keep native dtype end to end.
    x3 = x_nchw.reshape(B, C, HW)
    gamma_c = gamma.astype(jnp.float32).reshape(C, 1)
    betap_c = beta_param.astype(jnp.float32).reshape(C, 1)
    mtopk_c = mean_topk_buf.astype(jnp.float32).reshape(C, 1)

    cvec = jax.ShapeDtypeStruct((C, 1), jnp.float32)

    fused_ct = None if force_two_pass else _choose_channel_tile(
        C, B * HW * elt, min(block_target_bytes, 2 << 20), sublane)

    if fused_ct is not None:
        # ---------------- fused fast path: 1 read + 1 write ----------------
        ct = fused_ct
        nc = C // ct
        block_bytes = B * ct * HW * elt
        cvec_spec = pl.BlockSpec((ct, 1), lambda c: (c, 0))
        xo_spec = pl.BlockSpec((B, ct, HW), lambda c: (0, c, 0))

        fused_fn = pl.pallas_call(
            functools.partial(_fused_kernel, inv_hw=1.0 / HW, inv_b=1.0 / B),
            out_shape=(jax.ShapeDtypeStruct((B, C, HW), in_dtype), cvec, cvec),
            grid_spec=pltpu.PrefetchScalarGridSpec(
                num_scalar_prefetch=0,
                grid=(nc,),
                in_specs=[xo_spec, cvec_spec, cvec_spec, cvec_spec],
                out_specs=(xo_spec, cvec_spec, cvec_spec),
            ),
            compiler_params=pltpu.CompilerParams(
                dimension_semantics=("parallel",),
                vmem_limit_bytes=_vmem_limit_bytes(block_bytes),
            ),
            cost_estimate=pl.CostEstimate(
                flops=7 * total_elems, transcendentals=0,
                bytes_accessed=2 * total_elems * elt + 6 * C * 4),
        )
        out3, mean_c, mtopk_new_c = fused_fn(x3, gamma_c, betap_c, mtopk_c)
    else:
        # --------------------- two-pass fallback path ----------------------
        ct = _choose_channel_tile(C, HW * elt, block_target_bytes, sublane)
        if ct is None:
            ct = _smallest_channel_tile(C, sublane)
        nc = C // ct
        block_bytes = ct * HW * elt
        vmem = _vmem_limit_bytes(block_bytes)

        # -------- pass 1: statistics (grid = (C tiles, batch)) --------
        cvec_spec1 = pl.BlockSpec((ct, 1), lambda c, b: (c, 0))
        x_spec1 = pl.BlockSpec((None, ct, HW), lambda c, b: (b, c, 0))
        stats_fn = pl.pallas_call(
            functools.partial(_stats_kernel, inv_hw=1.0 / HW, inv_b=1.0 / B),
            out_shape=(cvec, cvec, cvec, cvec),          # mean, meanTOPK, a, b
            grid_spec=pltpu.PrefetchScalarGridSpec(
                num_scalar_prefetch=0,
                grid=(nc, B),
                in_specs=[x_spec1, cvec_spec1, cvec_spec1, cvec_spec1],
                out_specs=(cvec_spec1, cvec_spec1, cvec_spec1, cvec_spec1),
                scratch_shapes=[pltpu.VMEM((ct, 1), jnp.float32)] * 3,
            ),
            compiler_params=pltpu.CompilerParams(
                dimension_semantics=("parallel", "arbitrary"),
                vmem_limit_bytes=vmem,
            ),
            cost_estimate=pl.CostEstimate(
                flops=3 * total_elems, transcendentals=0,
                bytes_accessed=total_elems * elt + 7 * C * 4),
        )
        mean_c, mtopk_new_c, a_c, b_c = stats_fn(x3, gamma_c, betap_c, mtopk_c)

        # -------- pass 2: normalize (grid = (batch, C tiles)) --------
        cvec_spec2 = pl.BlockSpec((ct, 1), lambda b, c: (c, 0))
        x_spec2 = _x_block_spec((None, ct, HW), lambda b, c: (b, c, 0), buffers=3)
        out_spec2 = pl.BlockSpec((None, ct, HW), lambda b, c: (b, c, 0))
        norm_fn = pl.pallas_call(
            _normalize_kernel,
            out_shape=jax.ShapeDtypeStruct((B, C, HW), in_dtype),
            grid_spec=pltpu.PrefetchScalarGridSpec(
                num_scalar_prefetch=0,
                grid=(B, nc),
                in_specs=[x_spec2, cvec_spec2, cvec_spec2],
                out_specs=out_spec2,
            ),
            compiler_params=pltpu.CompilerParams(
                dimension_semantics=("parallel", "parallel"),
                vmem_limit_bytes=vmem,
            ),
            cost_estimate=pl.CostEstimate(
                flops=2 * total_elems, transcendentals=0,
                bytes_accessed=2 * total_elems * elt + 2 * C * 4),
        )
        out3 = norm_fn(x3, a_c, b_c)

    out = out3.reshape(B, C, H, W)
    new_mtopk = mtopk_new_c.reshape(C)
    mean_v = mean_c.reshape(C)
    scale_v = 1.0 / (new_mtopk + _EPS)

    # Buffer bookkeeping, exactly mirroring the module's in-place updates:
    #   running.mul_(momentum).add_(new * (1 - momentum))
    # (running_var intentionally stores the *scale*, as the PyTorch code does.)
    new_running_mean = running_mean * momentum + mean_v * (1.0 - momentum)
    new_running_var = running_var * momentum + scale_v * (1.0 - momentum)
    return out, new_mtopk, new_running_mean, new_running_var


# ----------------------------------------------------------------------------
# Pure-JAX reference mirroring the PyTorch training forward (f32 math).
# ----------------------------------------------------------------------------
def top1_reference(x_nchw, gamma, beta_param, mean_topk_buf):
    B, C, H, W = x_nchw.shape
    x = x_nchw.astype(jnp.float32)
    mean = x.reshape(B, C, -1).mean(-1).mean(0)                       # (C,)
    t = jnp.transpose(x, (1, 0, 2, 3)).reshape(C, -1)                 # (C, N)
    A = jnp.abs(t.T - mean)                                           # (N, C)
    mean_topk_batch = jnp.max(A, axis=0)                              # K=1 topk
    meantopk = _BLEND * mean_topk_buf + (1.0 - _BLEND) * mean_topk_batch
    scale = 1.0 / (meantopk + _EPS)
    out = (x - mean[None, :, None, None]) * scale[None, :, None, None]
    out = out * gamma[None, :, None, None] + beta_param[None, :, None, None]
    return out, meantopk


if __name__ == "__main__":
    key = jax.random.PRNGKey(0)
    kx, kg, kb, km = jax.random.split(key, 4)

    B, C, H, W = 2, 4, 16, 16
    x = jax.random.normal(kx, (B, C, H, W), dtype=jnp.float32)

    # Deterministic parameter / buffer init (the torch Parameters are
    # uninitialized in the module; we pick reproducible values).
    gamma = 1.0 + 0.1 * jax.random.normal(kg, (C,), dtype=jnp.float32)          # self.scale
    beta_param = 0.05 * jax.random.normal(kb, (C,), dtype=jnp.float32)          # self.mean
    mean_topk_buf = 0.5 + 0.1 * jax.random.normal(km, (C,), dtype=jnp.float32)  # self.meanTOPK
    running_mean = jnp.zeros((C,), dtype=jnp.float32)
    running_var = jnp.zeros((C,), dtype=jnp.float32)

    ref_out, ref_mtopk = top1_reference(x, gamma, beta_param, mean_topk_buf)

    # 1) fused single-pass path (auto-selected for small/medium activations)
    out, new_mtopk, new_rm, new_rv = top1_forward(
        x, gamma, beta_param, mean_topk_buf, running_mean, running_var)
    out = jax.block_until_ready(out)
    new_mtopk = jax.block_until_ready(new_mtopk)
    assert out.shape == (B, C, H, W) and out.dtype == x.dtype
    assert jnp.allclose(out, ref_out, atol=1e-5, rtol=1e-5), "fused output mismatch"
    assert jnp.allclose(new_mtopk, ref_mtopk, atol=1e-6, rtol=1e-6), "fused meanTOPK mismatch"

    # 2) tiled two-pass path (used automatically for large activations)
    out2, new_mtopk2, _, _ = top1_forward(
        x, gamma, beta_param, mean_topk_buf, running_mean, running_var,
        force_two_pass=True)
    out2 = jax.block_until_ready(out2)
    assert jnp.allclose(out2, ref_out, atol=1e-5, rtol=1e-5), "two-pass output mismatch"
    assert jnp.allclose(new_mtopk2, ref_mtopk, atol=1e-6, rtol=1e-6), "two-pass meanTOPK mismatch"

    # 3) native bf16 activations stay bf16 end to end (HBM-byte optimization)
    x_bf16 = x.astype(jnp.bfloat16)
    out_bf, mtopk_bf, _, _ = top1_forward(
        x_bf16, gamma, beta_param, mean_topk_buf, running_mean, running_var)
    out_bf = jax.block_until_ready(out_bf)
    ref_out_bf, ref_mtopk_bf = top1_reference(x_bf16, gamma, beta_param, mean_topk_buf)
    assert out_bf.dtype == jnp.bfloat16
    assert jnp.allclose(out_bf.astype(jnp.float32), ref_out_bf, atol=3e-2, rtol=3e-2), \
        "bf16 output mismatch"
    assert jnp.allclose(mtopk_bf, ref_mtopk_bf, atol=1e-5, rtol=1e-5), "bf16 meanTOPK mismatch"

    print("KERNEL_OK")
</pallas_src>

<mosaic_0001>
module attributes {stable_mosaic.version = 11 : i64} {
  func.func @_fused_kernel(%arg0: i32, %arg1: memref<2x4x256xf32, #tpu.memory_space<vmem>>, %arg2: memref<4x1xf32, #tpu.memory_space<vmem>>, %arg3: memref<4x1xf32, #tpu.memory_space<vmem>>, %arg4: memref<4x1xf32, #tpu.memory_space<vmem>>, %arg5: memref<2x4x256xf32, #tpu.memory_space<vmem>>, %arg6: memref<4x1xf32, #tpu.memory_space<vmem>>, %arg7: memref<4x1xf32, #tpu.memory_space<vmem>>) attributes {dimension_semantics = [#tpu.dimension_semantics<parallel>], iteration_bounds = array<i64: 1>, scalar_prefetch = 0 : i64, scratch_operands = 0 : i64, tpu.core_type = #tpu.core_type<tc>, window_params = [{transform_indices = @transform_0, window_bounds = array<i64: 2, 4, 256>}, {transform_indices = @transform_1, window_bounds = array<i64: 4, 1>}, {transform_indices = @transform_2, window_bounds = array<i64: 4, 1>}, {transform_indices = @transform_3, window_bounds = array<i64: 4, 1>}, {transform_indices = @transform_4, window_bounds = array<i64: 2, 4, 256>}, {transform_indices = @transform_5, window_bounds = array<i64: 4, 1>}, {transform_indices = @transform_6, window_bounds = array<i64: 4, 1>}]} {
    %c0 = arith.constant 0 : index
    %c0_0 = arith.constant 0 : index
    %c0_1 = arith.constant 0 : index
    %0 = vector.load %arg1[%c0, %c0_0, %c0_1] : memref<2x4x256xf32, #tpu.memory_space<vmem>>, vector<2x4x256xf32>
    %cst = arith.constant dense<0.000000e+00> : vector<2x4xf32>
    %1 = vector.multi_reduction <add>, %0, %cst [2] : vector<2x4x256xf32> to vector<2x4xf32>
    %2 = vector.shape_cast %1 : vector<2x4xf32> to vector<2x4x1xf32>
    %cst_2 = arith.constant 3.906250e-03 : f32
    %3 = vector.broadcast %cst_2 : f32 to vector<2x4x1xf32>
    %4 = arith.mulf %2, %3 : vector<2x4x1xf32>
    %cst_3 = arith.constant dense<0.000000e+00> : vector<4x1xf32>
    %5 = vector.multi_reduction <add>, %4, %cst_3 [0] : vector<2x4x1xf32> to vector<4x1xf32>
    %cst_4 = arith.constant 5.000000e-01 : f32
    %6 = vector.broadcast %cst_4 : f32 to vector<4x1xf32>
    %7 = arith.mulf %5, %6 : vector<4x1xf32>
    %cst_5 = arith.constant dense<0xFF800000> : vector<2x4xf32>
    %8 = vector.multi_reduction <maximumf>, %0, %cst_5 [2] : vector<2x4x256xf32> to vector<2x4xf32>
    %9 = vector.shape_cast %8 : vector<2x4xf32> to vector<2x4x1xf32>
    %cst_6 = arith.constant dense<0xFF800000> : vector<4x1xf32>
    %10 = vector.multi_reduction <maximumf>, %9, %cst_6 [0] : vector<2x4x1xf32> to vector<4x1xf32>
    %cst_7 = arith.constant dense<0x7F800000> : vector<2x4xf32>
    %11 = vector.multi_reduction <minimumf>, %0, %cst_7 [2] : vector<2x4x256xf32> to vector<2x4xf32>
    %12 = vector.shape_cast %11 : vector<2x4xf32> to vector<2x4x1xf32>
    %cst_8 = arith.constant dense<0x7F800000> : vector<4x1xf32>
    %13 = vector.multi_reduction <minimumf>, %12, %cst_8 [0] : vector<2x4x1xf32> to vector<4x1xf32>
    %14 = arith.subf %10, %7 : vector<4x1xf32>
    %15 = arith.subf %7, %13 : vector<4x1xf32>
    %16 = arith.maximumf %14, %15 : vector<4x1xf32>
    %c0_9 = arith.constant 0 : index
    %c0_10 = arith.constant 0 : index
    %17 = vector.load %arg4[%c0_9, %c0_10] : memref<4x1xf32, #tpu.memory_space<vmem>>, vector<4x1xf32>
    %cst_11 = arith.constant 4.000000e-01 : f32
    %18 = vector.broadcast %cst_11 : f32 to vector<4x1xf32>
    %19 = arith.mulf %18, %17 : vector<4x1xf32>
    %cst_12 = arith.constant 6.000000e-01 : f32
    %20 = vector.broadcast %cst_12 : f32 to vector<4x1xf32>
    %21 = arith.mulf %20, %16 : vector<4x1xf32>
    %22 = arith.addf %19, %21 : vector<4x1xf32>
    %c0_13 = arith.constant 0 : index
    %c0_14 = arith.constant 0 : index
    %23 = vector.load %arg2[%c0_13, %c0_14] : memref<4x1xf32, #tpu.memory_space<vmem>>, vector<4x1xf32>
    %cst_15 = arith.constant 1.000000e-07 : f32
    %24 = vector.broadcast %cst_15 : f32 to vector<4x1xf32>
    %25 = arith.addf %22, %24 : vector<4x1xf32>
    %26 = tpu.reciprocal %25 : vector<4x1xf32> -> vector<4x1xf32>
    %27 = arith.mulf %23, %26 : vector<4x1xf32>
    %c0_16 = arith.constant 0 : index
    %c0_17 = arith.constant 0 : index
    %28 = vector.load %arg3[%c0_16, %c0_17] : memref<4x1xf32, #tpu.memory_space<vmem>>, vector<4x1xf32>
    %29 = arith.mulf %7, %27 : vector<4x1xf32>
    %30 = arith.subf %28, %29 : vector<4x1xf32>
    %31 = vector.shape_cast %27 : vector<4x1xf32> to vector<1x4x1xf32>
    %32 = vector.broadcast %31 : vector<1x4x1xf32> to vector<2x4x256xf32>
    %33 = arith.mulf %0, %32 : vector<2x4x256xf32>
    %34 = vector.shape_cast %30 : vector<4x1xf32> to vector<1x4x1xf32>
    %35 = vector.broadcast %34 : vector<1x4x1xf32> to vector<2x4x256xf32>
    %36 = arith.addf %33, %35 : vector<2x4x256xf32>
    %c0_18 = arith.constant 0 : index
    %c0_19 = arith.constant 0 : index
    %c0_20 = arith.constant 0 : index
    %37 = vector.load %arg5[%c0_18, %c0_19, %c0_20] : memref<2x4x256xf32, #tpu.memory_space<vmem>>, vector<2x4x256xf32>
    tpu.vector_store %arg5[%c0_18, %c0_19, %c0_20], %36 {strides = array<i32>} : memref<2x4x256xf32, #tpu.memory_space<vmem>>, vector<2x4x256xf32>,
    %c0_21 = arith.constant 0 : index
    %c0_22 = arith.constant 0 : index
    %38 = vector.load %arg6[%c0_21, %c0_22] : memref<4x1xf32, #tpu.memory_space<vmem>>, vector<4x1xf32>
    tpu.vector_store %arg6[%c0_21, %c0_22], %7 {strides = array<i32>} : memref<4x1xf32, #tpu.memory_space<vmem>>, vector<4x1xf32>,
    %c0_23 = arith.constant 0 : index
    %c0_24 = arith.constant 0 : index
    %39 = vector.load %arg7[%c0_23, %c0_24] : memref<4x1xf32, #tpu.memory_space<vmem>>, vector<4x1xf32>
    tpu.vector_store %arg7[%c0_23, %c0_24], %22 {strides = array<i32>} : memref<4x1xf32, #tpu.memory_space<vmem>>, vector<4x1xf32>,
    return
  }
  func.func @transform_0(%arg0: i32) -> (i32, i32, i32) {
    %c0_i32 = arith.constant 0 : i32
    %c0_i32_0 = arith.constant 0 : i32
    %c0_i32_1 = arith.constant 0 : i32
    return %c0_i32, %arg0, %c0_i32_0 : i32, i32, i32
  }
  func.func @transform_1(%arg0: i32) -> (i32, i32) {
    %c0_i32 = arith.constant 0 : i32
    %c0_i32_0 = arith.constant 0 : i32
    return %arg0, %c0_i32 : i32, i32
  }
  func.func @transform_2(%arg0: i32) -> (i32, i32) {
    %c0_i32 = arith.constant 0 : i32
    %c0_i32_0 = arith.constant 0 : i32
    return %arg0, %c0_i32 : i32, i32
  }
  func.func @transform_3(%arg0: i32) -> (i32, i32) {
    %c0_i32 = arith.constant 0 : i32
    %c0_i32_0 = arith.constant 0 : i32
    return %arg0, %c0_i32 : i32, i32
  }
  func.func @transform_4(%arg0: i32) -> (i32, i32, i32) {
    %c0_i32 = arith.constant 0 : i32
    %c0_i32_0 = arith.constant 0 : i32
    %c0_i32_1 = arith.constant 0 : i32
    return %c0_i32, %arg0, %c0_i32_0 : i32, i32, i32
  }
  func.func @transform_5(%arg0: i32) -> (i32, i32) {
    %c0_i32 = arith.constant 0 : i32
    %c0_i32_0 = arith.constant 0 : i32
    return %arg0, %c0_i32 : i32, i32
  }
  func.func @transform_6(%arg0: i32) -> (i32, i32) {
    %c0_i32 = arith.constant 0 : i32
    %c0_i32_0 = arith.constant 0 : i32
    return %arg0, %c0_i32 : i32, i32
  }
}

</mosaic_0001>

<llo_original>
// kernel: tpu_custom_call.1
$region0: #{tpu_custom_call.1}
  #allocation0 [shape = 'u32[]', space=smem, size = 0x4, offset = 0x4, fixed_abs, tag = 'smem constant byte address 0x4 - core index']
  #allocation1 [shape = 'u32[144,128]{1,0:T(1,128)}', space=vmem, size = 0x12000, scoped, tag = 'internal scratch']
  %s0 = inlined_call_operand.hbm [shape: f32[2,4,256], index: 0, kind: input, shape index: {}]
  %s1 = inlined_call_operand.vmem [shape: f32[4,1], index: 1, kind: input, shape index: {}]
  %s2 = inlined_call_operand.vmem [shape: f32[4,1], index: 2, kind: input, shape index: {}]
  %s3 = inlined_call_operand.vmem [shape: f32[4,1], index: 3, kind: input, shape index: {}]
  %s4 = inlined_call_operand.hbm [shape: f32[2,4,256], index: 4, kind: output, shape index: {0}]
  %s5 = inlined_call_operand.vmem [shape: f32[4,1], index: 5, kind: output, shape index: {1}]
  %s6 = inlined_call_operand.vmem [shape: f32[4,1], index: 6, kind: output, shape index: {2}]
  %7 = xla_tuple %s4, %s5, %s6
  %s8 = sld [smem:[#allocation0]]
  $region46: #{tpu_custom_call.1} parent=0
    _
  %s10 = ssub.s32 1, %s8
  %s11 = scalar_select 0, %s10, %s8
  $region1: #{tpu_custom_call.1} parent=0
    #allocation2 [shape = 'u8[8192]{0}', space=vmem, size = 0x2000, scoped, tag = 'input window, operand 0, single buffered']
    #allocation3 [shape = 's32[1]{0}', space=sflag, size = 0x4, scoped, tag = 'scoped memory for tpu_custom_call.1']
    #allocation4 [shape = 's32[1]{0}', space=sflag, size = 0x4, scoped, tag = 'scoped memory for tpu_custom_call.1']
    #allocation5 [shape = 'u8[8192]{0}', space=vmem, size = 0x2000, scoped, tag = 'output window, operand 0, single buffered']
    %12 = vsyncpa [#allocation3], 0
    %13 = vsyncpa [#allocation4], 0
    // Predicated region
    $region2: #{tpu_custom_call.1} parent=1 // pred_check
      _
    $region3: #{tpu_custom_call.1} parent=1 // pred_check_branch
      %15 = sbr.rel (0) target = $region5
    $region4: #{tpu_custom_call.1} parent=1 // pred_region
      %s17 = ssub.s32 256, 256
      %18 = vsyncadd [#allocation3], %s17
      %s19 = sshll.u32 [#allocation2], 4
      %s20 = int_to_ptr.vmem [resolvable:$true] %s19
      %25 = dma.hbm_to_vmem [thread:$0]  %s0, 256, %s20, [#allocation3], 128, 128, 8
    $region5: #{tpu_custom_call.1} parent=1 // pred_fallthru
      _
    // Predicated region
    $region6: #{tpu_custom_call.1} parent=1 // pred_check
      _
    $region7: #{tpu_custom_call.1} parent=1 // pred_check_branch
      %27 = sbr.rel (0) target = $region9
    $region8: #{tpu_custom_call.1} parent=1 // pred_region
      _
    $region9: #{tpu_custom_call.1} parent=1 // pred_fallthru
      _
    // Predicated region
    $region10: #{tpu_custom_call.1} parent=1 // pred_check
      _
    $region11: #{tpu_custom_call.1} parent=1 // pred_check_branch
      %29 = sbr.rel (0) target = $region13
    $region12: #{tpu_custom_call.1} parent=1 // pred_region
      _
    $region13: #{tpu_custom_call.1} parent=1 // pred_fallthru
      _
    // Predicated region
    $region14: #{tpu_custom_call.1} parent=1 // pred_check
      _
    $region15: #{tpu_custom_call.1} parent=1 // pred_check_branch
      %31 = sbr.rel (0) target = $region17
    $region16: #{tpu_custom_call.1} parent=1 // pred_region
      _
    $region17: #{tpu_custom_call.1} parent=1 // pred_fallthru
      _
    // Predicated region
    $region18: #{tpu_custom_call.1} parent=1 // pred_check
      _
    $region19: #{tpu_custom_call.1} parent=1 // pred_check_branch
      %33 = sbr.rel (0) target = $region21
    $region20: #{tpu_custom_call.1} parent=1 // pred_region
      %34 = dma.done [#allocation3], 256
    $region21: #{tpu_custom_call.1} parent=1 // pred_fallthru
      _
    %v35 = vld [vmem:[#allocation2] sm:$0xff]
    %v36 = vld [vmem:[#allocation2 + $0x8] sm:$0xff]
    %v39 = vcombine.high %v35, %v35
    %v40 = vcombine.high %v36, %v36
    %vm43 = vcmask 1043456
    %v44 = vsel %vm43, %v35, 0.0
    %v45 = vsel %vm43, %v39, 0.0
    %v46 = vadd.f32 %v44, %v45
    %47 = vadd.xlane.f32.xlu0 %v46
    %v48 = vpop.xlane.xlu0 %47
    %v49 = vsel %vm43, %v36, 0.0
    %v50 = vsel %vm43, %v40, 0.0
    %v51 = vadd.f32 %v49, %v50
    %52 = vadd.xlane.f32.xlu0 %v51
    %v53 = vpop.xlane.xlu0 %52
    %v54 = vmul.f32 %v48, 0.00390625
    %v55 = vmul.f32 %v53, 0.00390625
    %v56 = vsel %vm43, %v54, 0.0
    %v57 = vsel %vm43, %v55, 0.0
    %v58 = vadd.f32 %v56, %v57
    %v59 = vmul.f32 %v58, 0.5
    %v60 = vsel %vm43, %v35, -inf
    %v61 = vsel %vm43, %v39, -inf
    %v62 = vmax.f32 %v60, %v61
    %63 = vmax.xlane.f32.xlu0 %v62
    %v64 = vpop.xlane.xlu0 %63
    %v65 = vsel %vm43, %v36, -inf
    %v66 = vsel %vm43, %v40, -inf
    %v67 = vmax.f32 %v65, %v66
    %68 = vmax.xlane.f32.xlu0 %v67
    %v69 = vpop.xlane.xlu0 %68
    %v70 = vsel %vm43, %v64, -inf
    %v71 = vsel %vm43, %v69, -inf
    %v72 = vmax.f32 %v70, %v71
    %v73 = vsel %vm43, %v35, inf
    %v74 = vsel %vm43, %v39, inf
    %v75 = vmin.f32 %v73, %v74
    %76 = vmin.xlane.f32.xlu0 %v75
    %v77 = vpop.xlane.xlu0 %76
    %v78 = vsel %vm43, %v36, inf
    %v79 = vsel %vm43, %v40, inf
    %v80 = vmin.f32 %v78, %v79
    %81 = vmin.xlane.f32.xlu0 %v80
    %v82 = vpop.xlane.xlu0 %81
    %v83 = vsel %vm43, %v77, inf
    %v84 = vsel %vm43, %v82, inf
    %v85 = vmin.f32 %v83, %v84
    %v86 = vsub.f32 %v72, %v59
    %v87 = vsub.f32 %v59, %v85
    %v88 = vmax.f32 %v86, %v87
    %v89 = vld [vmem:[%s3] sm:$0xf]
    %v90 = vmul.f32 %v89, 0.4
    %v91 = vmul.f32 %v88, 0.6
    %v92 = vadd.f32 %v90, %v91
    %v93 = vld [vmem:[%s1] sm:$0xf]
    %v94 = vadd.f32 %v92, 1e-07
    %v95 = vrcp.pop %v94
    %v96 = vmul.f32 %v93, %v95
    %v97 = vld [vmem:[%s2] sm:$0xf]
    %v98 = vmul.f32 %v59, %v96
    %v99 = vsub.f32 %v97, %v98
    %101 = vset.pattern.permute.xlu0 0
    %102 = vperm.xlu0 %101, %v96
    %v103 = vpop.permute.xlu0 %102
    %v105 = vunpack.c.l.s4 839922192
    %v106 = vunpack.c.0.s8 %v105
    %v107 = vlaneseq
    %v108 = vshrl.u32 %v107, 7
    %v109 = vsub.s32 %v106, %v108
    %v110 = vrot.slane %v103, %v109
    %v112 = vmul.f32 %v35, %v110
    %v113 = vmul.f32 %v36, %v110
    %115 = vset.pattern.permute.xlu0 0
    %116 = vperm.xlu0 %115, %v99
    %v117 = vpop.permute.xlu0 %116
    %v119 = vunpack.c.l.s4 839922192
    %v120 = vunpack.c.0.s8 %v119
    %v121 = vlaneseq
    %v122 = vshrl.u32 %v121, 7
    %v123 = vsub.s32 %v120, %v122
    %v124 = vrot.slane %v117, %v123
    %v126 = vadd.f32 %v112, %v124
    %v127 = vadd.f32 %v113, %v124
    %128 = vst [vmem:[#allocation5] sm:$0xff] %v126
    %129 = vst [vmem:[#allocation5 + $0x8] sm:$0xff] %v127
    %vm130 = vcmask 3072
    %131 = vst.msk [vmem:[%s5] sm:$0xf] %vm130, %v59
    %132 = vst.msk [vmem:[%s6] sm:$0xf] %vm130, %v92
    // Predicated region
    $region22: #{tpu_custom_call.1} parent=1 // pred_check
      _
    $region23: #{tpu_custom_call.1} parent=1 // pred_check_branch
      %134 = sbr.rel (0) target = $region25
    $region24: #{tpu_custom_call.1} parent=1 // pred_region
      %s136 = ssub.s32 256, 256
      %137 = vsyncadd [#allocation4], %s136
      %s138 = sshll.u32 [#allocation5], 4
      %s139 = int_to_ptr.vmem [resolvable:$true] %s138
      %144 = dma.vmem_to_hbm [thread:$0]  %s139, 256, %s4, [#allocation4], 128, 128, 8
    $region25: #{tpu_custom_call.1} parent=1 // pred_fallthru
      _
    // Predicated region
    $region26: #{tpu_custom_call.1} parent=1 // pred_check
      _
    $region27: #{tpu_custom_call.1} parent=1 // pred_check_branch
      %146 = sbr.rel (0) target = $region29
    $region28: #{tpu_custom_call.1} parent=1 // pred_region
      _
    $region29: #{tpu_custom_call.1} parent=1 // pred_fallthru
      _
    // Predicated region
    $region30: #{tpu_custom_call.1} parent=1 // pred_check
      _
    $region31: #{tpu_custom_call.1} parent=1 // pred_check_branch
      %148 = sbr.rel (0) target = $region33
    $region32: #{tpu_custom_call.1} parent=1 // pred_region
      _
    $region33: #{tpu_custom_call.1} parent=1 // pred_fallthru
      _
    // Predicated region
    $region34: #{tpu_custom_call.1} parent=1 // pred_check
      _
    $region35: #{tpu_custom_call.1} parent=1 // pred_check_branch
      %150 = sbr.rel (0) target = $region37
    $region36: #{tpu_custom_call.1} parent=1 // pred_region
      %151 = dma.done [#allocation4], 256
    $region37: #{tpu_custom_call.1} parent=1 // pred_fallthru
      _
    // Predicated region
    $region38: #{tpu_custom_call.1} parent=1 // pred_check
      _
    $region39: #{tpu_custom_call.1} parent=1 // pred_check_branch
      %153 = sbr.rel (0) target = $region41
    $region40: #{tpu_custom_call.1} parent=1 // pred_region
      _
    $region41: #{tpu_custom_call.1} parent=1 // pred_fallthru
      _
    // Predicated region
    $region42: #{tpu_custom_call.1} parent=1 // pred_check
      _
    $region43: #{tpu_custom_call.1} parent=1 // pred_check_branch
      %155 = sbr.rel (0) target = $region45
    $region44: #{tpu_custom_call.1} parent=1 // pred_region
      _
    $region45: #{tpu_custom_call.1} parent=1 // pred_fallthru
      _
    %156 = vsyncpa [#allocation3], 1
    %157 = vsyncpa [#allocation4], 1

</llo_original>
